<compile_context>
chip_gen: v7x
topology: tpu7x:2x2x1
jax: 0.10.0
libtpu: 0.0.40
codegen_flags: <defaults>
</compile_context>

<pallas_src>
import functools

import jax
import jax.numpy as jnp
from jax import lax
from jax.experimental import pallas as pl
from jax.experimental.pallas import tpu as pltpu

EPS_PPO = 1e-05
LANES = 128

# ---- config constants (config.RL.PPO.*), deterministic, baked in-script ----
CLIP_PARAM = 0.2
VALUE_LOSS_COEF = 0.5
ENTROPY_COEF = 0.01

# Single-block (grid-less) path only while everything comfortably fits VMEM;
# larger rollouts use the gridded two-phase path.
MAX_SINGLE_BLOCK_ROWS = 1024          # 1024 rows * 128 lanes * 4 B = 512 KiB / tensor
TILE_ROWS = 512                       # 256 KiB / input tile, double-buffered
VMEM_LIMIT_BYTES = 32 * 1024 * 1024   # explicit, safe on v5e / v6e / v7x


# ---------------------------------------------------------------------------
# layout helpers
# ---------------------------------------------------------------------------
def _to_lane_dense(x, row_multiple=1):
    """Flatten to 1-D and reshape to (R, 128) lane-dense rows.

    Padding is only materialized when the size is not already lane/row aligned
    (and this runs inside jax.jit so it fuses with the kernel launch)."""
    flat = jnp.asarray(x, jnp.float32).reshape(-1)
    b = flat.shape[0]
    rows = -(-b // LANES)
    rows = -(-rows // row_multiple) * row_multiple
    total = rows * LANES
    if total != b:
        flat = jnp.pad(flat, (0, total - b))
    return flat.reshape(rows, LANES), b


def _valid_mask(shape, n_valid):
    row = lax.broadcasted_iota(jnp.int32, shape, 0)
    lane = lax.broadcasted_iota(jnp.int32, shape, 1)
    return (row * shape[1] + lane) < n_valid


def _tile_mask(shape, tile_idx, n_valid):
    tr, lanes = shape
    base = tile_idx * (tr * lanes)
    row = lax.broadcasted_iota(jnp.int32, shape, 0)
    lane = lax.broadcasted_iota(jnp.int32, shape, 1)
    return (base + row * lanes + lane) < n_valid


def _pack_losses(actions_loss, values_loss, total_loss):
    """Pack three scalars into one lane-dense (1, 128) tile (single store)."""
    lane = lax.broadcasted_iota(jnp.int32, (1, LANES), 1)
    return jnp.where(lane == 0, actions_loss,
                     jnp.where(lane == 1, values_loss,
                               jnp.where(lane == 2, total_loss, 0.0)))


def _mean_invstd(s, ss, n_valid):
    """One-pass mean / unbiased (N-1) std, clamped against f32 cancellation."""
    inv_n = 1.0 / n_valid
    mean = s * inv_n
    var = jnp.maximum((ss - s * s * inv_n) / (n_valid - 1), 0.0)
    inv_std = 1.0 / (jnp.sqrt(var) + EPS_PPO)
    return mean, inv_std


# ---------------------------------------------------------------------------
# single-block kernels (rollout fits one VMEM block)
# ---------------------------------------------------------------------------
def _make_adv_kernel(n_valid):
    def kernel(r_ref, vp_ref, adv_ref):
        valid = _valid_mask(r_ref.shape, n_valid)
        adv = jnp.where(valid, r_ref[...] - vp_ref[...], 0.0)
        mean, inv_std = _mean_invstd(jnp.sum(adv), jnp.sum(adv * adv), n_valid)
        # mask AFTER normalization so padded lanes are exactly 0
        adv_ref[...] = jnp.where(valid, (adv - mean) * inv_std, 0.0)
    return kernel


def _make_fused_kernel(n_valid, clip_param, value_loss_coef, entropy_coef,
                       write_adv):
    def kernel(r_ref, vp_ref, lp_ref, olp_ref, val_ref, ent_ref, *outs):
        if write_adv:
            adv_ref, loss_ref = outs
        else:
            adv_ref = None
            (loss_ref,) = outs

        valid = _valid_mask(r_ref.shape, n_valid)
        inv_n = 1.0 / n_valid

        # --- get_advantages (one-pass mean / unbiased variance) ---
        adv = jnp.where(valid, r_ref[...] - vp_ref[...], 0.0)
        mean, inv_std = _mean_invstd(jnp.sum(adv), jnp.sum(adv * adv), n_valid)
        adv_norm = jnp.where(valid, (adv - mean) * inv_std, 0.0)
        if write_adv:
            adv_ref[...] = adv_norm

        # --- clipped surrogate + value loss ---
        ratio = jnp.exp(lp_ref[...] - olp_ref[...])
        surr1 = ratio * adv_norm
        surr2 = jnp.clip(ratio, 1.0 - clip_param, 1.0 + clip_param) * adv_norm
        actions_loss = -(jnp.sum(jnp.where(valid, jnp.minimum(surr1, surr2),
                                           0.0)) * inv_n)
        diff = jnp.where(valid, r_ref[...] - val_ref[...], 0.0)
        values_loss = 0.5 * (jnp.sum(diff * diff) * inv_n)
        total = (actions_loss + values_loss * value_loss_coef
                 - ent_ref[0] * entropy_coef)
        loss_ref[...] = _pack_losses(actions_loss, values_loss, total)
    return kernel


# ---------------------------------------------------------------------------
# gridded two-phase kernels (large rollouts)
# ---------------------------------------------------------------------------
def _make_stats_kernel(n_valid):
    """Phase 1: tiled sum / sum-of-squares of (returns - value_preds).
    Output (8,128): row 0 = mean (all lanes), row 1 = 1/std (all lanes)."""
    def kernel(r_ref, vp_ref, stats_ref, acc_s, acc_ss):
        t = pl.program_id(0)

        @pl.when(t == 0)
        def _():
            acc_s[...] = jnp.zeros_like(acc_s)
            acc_ss[...] = jnp.zeros_like(acc_ss)

        valid = _tile_mask(r_ref.shape, t, n_valid)
        adv = jnp.where(valid, r_ref[...] - vp_ref[...], 0.0)
        acc_s[...] += jnp.sum(adv, axis=0, keepdims=True)
        acc_ss[...] += jnp.sum(adv * adv, axis=0, keepdims=True)

        @pl.when(t == pl.num_programs(0) - 1)
        def _():
            mean, inv_std = _mean_invstd(jnp.sum(acc_s[...]),
                                         jnp.sum(acc_ss[...]), n_valid)
            row = lax.broadcasted_iota(jnp.int32, stats_ref.shape, 0)
            stats_ref[...] = jnp.where(row == 0, mean,
                                       jnp.where(row == 1, inv_std, 0.0))
    return kernel


def _make_normalize_kernel(n_valid):
    """Phase 2 of the standalone get_advantages: apply (adv - mean) * inv_std."""
    def kernel(stats_ref, r_ref, vp_ref, adv_ref):
        t = pl.program_id(0)
        valid = _tile_mask(r_ref.shape, t, n_valid)
        stats = stats_ref[...]
        mean_row = stats[0:1, :]
        istd_row = stats[1:2, :]
        adv = jnp.where(valid, r_ref[...] - vp_ref[...], 0.0)
        adv_ref[...] = jnp.where(valid, (adv - mean_row) * istd_row, 0.0)
    return kernel


def _make_tiled_loss_kernel(n_valid, clip_param, value_loss_coef, entropy_coef,
                            write_adv):
    """Phase 2 of the fused update: normalize + clipped-PPO loss partial sums."""
    def kernel(stats_ref, ent_ref, r_ref, vp_ref, lp_ref, olp_ref, val_ref,
               *rest):
        if write_adv:
            adv_ref, loss_ref, acc_a, acc_v = rest
        else:
            adv_ref = None
            loss_ref, acc_a, acc_v = rest

        t = pl.program_id(0)

        @pl.when(t == 0)
        def _():
            acc_a[...] = jnp.zeros_like(acc_a)
            acc_v[...] = jnp.zeros_like(acc_v)

        valid = _tile_mask(r_ref.shape, t, n_valid)
        stats = stats_ref[...]
        mean_row = stats[0:1, :]
        istd_row = stats[1:2, :]

        adv = jnp.where(valid, r_ref[...] - vp_ref[...], 0.0)
        adv_norm = jnp.where(valid, (adv - mean_row) * istd_row, 0.0)
        if write_adv:
            adv_ref[...] = adv_norm

        ratio = jnp.exp(lp_ref[...] - olp_ref[...])
        surr1 = ratio * adv_norm
        surr2 = jnp.clip(ratio, 1.0 - clip_param, 1.0 + clip_param) * adv_norm
        min_surr = jnp.where(valid, jnp.minimum(surr1, surr2), 0.0)
        diff = jnp.where(valid, r_ref[...] - val_ref[...], 0.0)

        acc_a[...] += jnp.sum(min_surr, axis=0, keepdims=True)
        acc_v[...] += jnp.sum(diff * diff, axis=0, keepdims=True)

        @pl.when(t == pl.num_programs(0) - 1)
        def _():
            inv_n = 1.0 / n_valid
            actions_loss = -(jnp.sum(acc_a[...]) * inv_n)
            values_loss = 0.5 * (jnp.sum(acc_v[...]) * inv_n)
            total = (actions_loss + values_loss * value_loss_coef
                     - ent_ref[0] * entropy_coef)
            loss_ref[...] = _pack_losses(actions_loss, values_loss, total)
    return kernel


def _stats_tiled(r2, v2, b, tr):
    """Run the phase-1 stats kernel over (R // tr) tiles."""
    R, _ = r2.shape
    n_tiles = R // tr
    return pl.pallas_call(
        _make_stats_kernel(b),
        out_shape=jax.ShapeDtypeStruct((8, LANES), jnp.float32),
        grid=(n_tiles,),
        in_specs=[pl.BlockSpec((tr, LANES), lambda t: (t, 0)),
                  pl.BlockSpec((tr, LANES), lambda t: (t, 0))],
        out_specs=pl.BlockSpec((8, LANES), lambda t: (0, 0)),
        scratch_shapes=[pltpu.VMEM((1, LANES), jnp.float32),
                        pltpu.VMEM((1, LANES), jnp.float32)],
        compiler_params=pltpu.CompilerParams(
            dimension_semantics=("arbitrary",),
            vmem_limit_bytes=VMEM_LIMIT_BYTES),
    )(r2, v2)


# ---------------------------------------------------------------------------
# public wrappers (fully jitted so layout plumbing fuses with the kernels)
# ---------------------------------------------------------------------------
@functools.partial(jax.jit, static_argnames=("tile_rows",))
def get_advantages(returns, value_preds, *, tile_rows=None):
    """rollout.returns - rollout.value_preds, normalized (mean 0, std 1)."""
    assert returns.shape == value_preds.shape
    b = returns.size
    assert b > 1, "unbiased std needs more than one rollout element"

    rows_natural = -(-b // LANES)
    use_tiled = (tile_rows is not None) or (rows_natural > MAX_SINGLE_BLOCK_ROWS)

    if not use_tiled:
        r2, _ = _to_lane_dense(returns)
        v2, _ = _to_lane_dense(value_preds)
        R, L = r2.shape
        adv = pl.pallas_call(
            _make_adv_kernel(b),
            out_shape=jax.ShapeDtypeStruct((R, L), jnp.float32),
            in_specs=[pl.BlockSpec((R, L), lambda: (0, 0)),
                      pl.BlockSpec((R, L), lambda: (0, 0))],
            out_specs=pl.BlockSpec((R, L), lambda: (0, 0)),
        )(r2, v2)
    else:
        tr = TILE_ROWS if tile_rows is None else tile_rows
        r2, _ = _to_lane_dense(returns, row_multiple=tr)
        v2, _ = _to_lane_dense(value_preds, row_multiple=tr)
        R, _ = r2.shape
        n_tiles = R // tr
        stats = _stats_tiled(r2, v2, b, tr)
        adv = pl.pallas_call(
            _make_normalize_kernel(b),
            out_shape=jax.ShapeDtypeStruct((R, LANES), jnp.float32),
            grid=(n_tiles,),
            in_specs=[pl.BlockSpec((8, LANES), lambda t: (0, 0)),
                      pl.BlockSpec((tr, LANES), lambda t: (t, 0)),
                      pl.BlockSpec((tr, LANES), lambda t: (t, 0))],
            out_specs=pl.BlockSpec((tr, LANES), lambda t: (t, 0)),
            compiler_params=pltpu.CompilerParams(
                dimension_semantics=("parallel",),
                vmem_limit_bytes=VMEM_LIMIT_BYTES),
        )(stats, r2, v2)

    return adv.reshape(-1)[:b].reshape(returns.shape)


@functools.partial(
    jax.jit,
    static_argnames=("clip_param", "value_loss_coef", "entropy_coef",
                     "return_advantages", "tile_rows"))
def ppo_update_fused(returns, value_preds, actions_log_probs,
                     old_action_log_probs, value, entropy, *,
                     clip_param=CLIP_PARAM, value_loss_coef=VALUE_LOSS_COEF,
                     entropy_coef=ENTROPY_COEF, return_advantages=False,
                     tile_rows=None):
    """Full-rollout minibatch path (num_mini_batch == 1): advantages
    normalization + clipped PPO loss.  Returns
    (advantages_or_None, actions_loss, values_loss, total_loss)."""
    b = returns.size
    assert b > 1, "unbiased std needs more than one rollout element"
    ent = jnp.asarray(entropy, jnp.float32).reshape(1)   # SMEM scalar

    rows_natural = -(-b // LANES)
    use_tiled = (tile_rows is not None) or (rows_natural > MAX_SINGLE_BLOCK_ROWS)

    if not use_tiled:
        tensors = [_to_lane_dense(x)[0]
                   for x in (returns, value_preds, actions_log_probs,
                             old_action_log_probs, value)]
        R, L = tensors[0].shape
        full_spec = pl.BlockSpec((R, L), lambda: (0, 0))
        out_shapes, out_specs = [], []
        if return_advantages:
            out_shapes.append(jax.ShapeDtypeStruct((R, L), jnp.float32))
            out_specs.append(pl.BlockSpec((R, L), lambda: (0, 0)))
        out_shapes.append(jax.ShapeDtypeStruct((1, LANES), jnp.float32))
        out_specs.append(pl.BlockSpec((1, LANES), lambda: (0, 0)))

        outs = pl.pallas_call(
            _make_fused_kernel(b, clip_param, value_loss_coef, entropy_coef,
                               return_advantages),
            out_shape=tuple(out_shapes),
            in_specs=[full_spec] * 5
                     + [pl.BlockSpec(memory_space=pltpu.MemorySpace.SMEM)],
            out_specs=tuple(out_specs),
        )(*tensors, ent)
    else:
        tr = TILE_ROWS if tile_rows is None else tile_rows
        tensors = [_to_lane_dense(x, row_multiple=tr)[0]
                   for x in (returns, value_preds, actions_log_probs,
                             old_action_log_probs, value)]
        R, _ = tensors[0].shape
        n_tiles = R // tr

        # phase 1: global mean / 1/std (only touches returns & value_preds)
        stats = _stats_tiled(tensors[0], tensors[1], b, tr)

        # phase 2: normalize + loss partial sums, finalized on the last tile
        tile_spec = pl.BlockSpec((tr, LANES), lambda t: (t, 0))
        in_specs = ([pl.BlockSpec((8, LANES), lambda t: (0, 0)),
                     pl.BlockSpec(memory_space=pltpu.MemorySpace.SMEM)]
                    + [tile_spec] * 5)
        out_shapes, out_specs = [], []
        if return_advantages:
            out_shapes.append(jax.ShapeDtypeStruct((R, LANES), jnp.float32))
            out_specs.append(pl.BlockSpec((tr, LANES), lambda t: (t, 0)))
        out_shapes.append(jax.ShapeDtypeStruct((1, LANES), jnp.float32))
        out_specs.append(pl.BlockSpec((1, LANES), lambda t: (0, 0)))

        outs = pl.pallas_call(
            _make_tiled_loss_kernel(b, clip_param, value_loss_coef,
                                    entropy_coef, return_advantages),
            out_shape=tuple(out_shapes),
            grid=(n_tiles,),
            in_specs=in_specs,
            out_specs=tuple(out_specs),
            scratch_shapes=[pltpu.VMEM((1, LANES), jnp.float32),
                            pltpu.VMEM((1, LANES), jnp.float32)],
            compiler_params=pltpu.CompilerParams(
                dimension_semantics=("arbitrary",),
                vmem_limit_bytes=VMEM_LIMIT_BYTES),
        )(stats, ent, *tensors)

    if return_advantages:
        adv_pad, losses = outs
        advantages = adv_pad.reshape(-1)[:b].reshape(returns.shape)
    else:
        (losses,) = outs
        advantages = None
    return advantages, losses[0, 0], losses[0, 1], losses[0, 2]


# ---------------------------------------------------------------------------
if __name__ == "__main__":
    key = jax.random.PRNGKey(0)
    keys = jax.random.split(key, 12)

    def reference(returns, value_preds, lp, olp, value, entropy):
        adv = returns - value_preds
        adv = (adv - adv.mean()) / (adv.std(ddof=1) + EPS_PPO)
        ratio = jnp.exp(lp - olp)
        s1 = ratio * adv
        s2 = jnp.clip(ratio, 1.0 - CLIP_PARAM, 1.0 + CLIP_PARAM) * adv
        a = -jnp.minimum(s1, s2).mean()
        v = 0.5 * jnp.mean((returns - value) ** 2)
        t = a + v * VALUE_LOSS_COEF - entropy * ENTROPY_COEF
        return adv, a, v, t

    # ------------------------------------------------------------------
    # 1) small lane-aligned rollout (T*N = 128) -> single-block fused path
    # ------------------------------------------------------------------
    T, N = 8, 16
    returns = jax.random.normal(keys[0], (T, N), dtype=jnp.float32)
    value_preds = jax.random.normal(keys[1], (T, N), dtype=jnp.float32)
    actions_log_probs = -jnp.abs(jax.random.normal(keys[2], (T, N), jnp.float32))
    old_action_log_probs = -jnp.abs(jax.random.normal(keys[3], (T, N), jnp.float32))
    value = jax.random.normal(keys[4], (T, N), dtype=jnp.float32)
    entropy = jnp.abs(jax.random.normal(keys[5], (), dtype=jnp.float32))

    adv_standalone = get_advantages(returns, value_preds)
    advantages, actions_loss, values_loss, total_loss = ppo_update_fused(
        returns, value_preds, actions_log_probs, old_action_log_probs,
        value, entropy, return_advantages=True)
    # loss-only path: the advantages HBM writeback is dropped entirely
    _, a_only, v_only, t_only = ppo_update_fused(
        returns, value_preds, actions_log_probs, old_action_log_probs,
        value, entropy, return_advantages=False)

    jax.block_until_ready((adv_standalone, advantages, actions_loss,
                           values_loss, total_loss, a_only, v_only, t_only))

    adv_ref, a_ref, v_ref, t_ref = reference(
        returns, value_preds, actions_log_probs, old_action_log_probs,
        value, entropy)
    assert jnp.allclose(adv_standalone, adv_ref, atol=1e-5)
    assert jnp.allclose(advantages, adv_ref, atol=1e-5)
    assert jnp.allclose(actions_loss, a_ref, atol=1e-5)
    assert jnp.allclose(values_loss, v_ref, atol=1e-5)
    assert jnp.allclose(total_loss, t_ref, atol=1e-5)
    assert jnp.allclose(a_only, a_ref, atol=1e-5)
    assert jnp.allclose(v_only, v_ref, atol=1e-5)
    assert jnp.allclose(t_only, t_ref, atol=1e-5)

    # ------------------------------------------------------------------
    # 2) ragged rollout (T*N = 4112, not a multiple of 128) forced through
    #    the gridded two-phase path (small tile to exercise multi-tile accum)
    # ------------------------------------------------------------------
    T2, N2 = 16, 257
    returns2 = jax.random.normal(keys[6], (T2, N2), dtype=jnp.float32)
    value_preds2 = jax.random.normal(keys[7], (T2, N2), dtype=jnp.float32)
    lp2 = -jnp.abs(jax.random.normal(keys[8], (T2, N2), jnp.float32))
    olp2 = -jnp.abs(jax.random.normal(keys[9], (T2, N2), jnp.float32))
    value2 = jax.random.normal(keys[10], (T2, N2), dtype=jnp.float32)
    entropy2 = jnp.abs(jax.random.normal(keys[11], (), dtype=jnp.float32))

    adv2_standalone = get_advantages(returns2, value_preds2, tile_rows=8)
    advantages2, a2, v2, t2 = ppo_update_fused(
        returns2, value_preds2, lp2, olp2, value2, entropy2,
        return_advantages=True, tile_rows=8)
    jax.block_until_ready((adv2_standalone, advantages2, a2, v2, t2))

    adv2_ref, a2_ref, v2_ref, t2_ref = reference(
        returns2, value_preds2, lp2, olp2, value2, entropy2)
    assert jnp.allclose(adv2_standalone, adv2_ref, atol=1e-4)
    assert jnp.allclose(advantages2, adv2_ref, atol=1e-4)
    assert jnp.allclose(a2, a2_ref, atol=1e-3, rtol=1e-3)
    assert jnp.allclose(v2, v2_ref, atol=1e-3, rtol=1e-3)
    assert jnp.allclose(t2, t2_ref, atol=1e-3, rtol=1e-3)

    print("KERNEL_OK")
</pallas_src>

<mosaic_0001>
module attributes {stable_mosaic.version = 11 : i64} {
  func.func @kernel(%arg0: memref<1x128xf32, #tpu.memory_space<vmem>>, %arg1: memref<1x128xf32, #tpu.memory_space<vmem>>, %arg2: memref<1x128xf32, #tpu.memory_space<vmem>>) attributes {dimension_semantics = [], scalar_prefetch = 0 : i64, scratch_operands = 0 : i64, tpu.core_type = #tpu.core_type<tc>} {
    %0 = tpu.iota {dimensions = array<i32: 0>} : vector<1x128xi32>
    %1 = tpu.iota {dimensions = array<i32: 1>} : vector<1x128xi32>
    %c128_i32 = arith.constant 128 : i32
    %2 = vector.broadcast %c128_i32 : i32 to vector<1x128xi32>
    %3 = arith.muli %0, %2 : vector<1x128xi32>
    %4 = arith.addi %3, %1 : vector<1x128xi32>
    %c128_i32_0 = arith.constant 128 : i32
    %5 = vector.broadcast %c128_i32_0 : i32 to vector<1x128xi32>
    %6 = arith.cmpi slt, %4, %5 : vector<1x128xi32>
    %c0 = arith.constant 0 : index
    %c0_1 = arith.constant 0 : index
    %7 = vector.load %arg0[%c0, %c0_1] : memref<1x128xf32, #tpu.memory_space<vmem>>, vector<1x128xf32>
    %c0_2 = arith.constant 0 : index
    %c0_3 = arith.constant 0 : index
    %8 = vector.load %arg1[%c0_2, %c0_3] : memref<1x128xf32, #tpu.memory_space<vmem>>, vector<1x128xf32>
    %9 = arith.subf %7, %8 : vector<1x128xf32>
    %cst = arith.constant 0.000000e+00 : f32
    %10 = vector.broadcast %cst : f32 to vector<1x128xf32>
    %11 = arith.select %6, %9, %10 : vector<1x128xi1>, vector<1x128xf32>
    %12 = vector.shape_cast %11 : vector<1x128xf32> to vector<1x1x128xf32>
    %cst_4 = arith.constant dense<0.000000e+00> : vector<1xf32>
    %13 = vector.multi_reduction <add>, %12, %cst_4 [1, 2] : vector<1x1x128xf32> to vector<1xf32>
    %14 = vector.shape_cast %13 : vector<1xf32> to vector<1x1x1xf32>
    %15 = vector.extract %14[0, 0, 0] : f32 from vector<1x1x1xf32>
    %16 = arith.mulf %11, %11 : vector<1x128xf32>
    %17 = vector.shape_cast %16 : vector<1x128xf32> to vector<1x1x128xf32>
    %cst_5 = arith.constant dense<0.000000e+00> : vector<1xf32>
    %18 = vector.multi_reduction <add>, %17, %cst_5 [1, 2] : vector<1x1x128xf32> to vector<1xf32>
    %19 = vector.shape_cast %18 : vector<1xf32> to vector<1x1x1xf32>
    %20 = vector.extract %19[0, 0, 0] : f32 from vector<1x1x1xf32>
    %cst_6 = arith.constant 7.812500e-03 : f32
    %21 = arith.mulf %15, %cst_6 : f32
    %22 = arith.mulf %15, %15 : f32
    %cst_7 = arith.constant 7.812500e-03 : f32
    %23 = arith.mulf %22, %cst_7 : f32
    %24 = arith.subf %20, %23 : f32
    %cst_8 = arith.constant 1.270000e+02 : f32
    %25 = arith.divf %24, %cst_8 : f32
    %cst_9 = arith.constant 0.000000e+00 : f32
    %26 = arith.maximumf %25, %cst_9 : f32
    %27 = math.sqrt %26 : f32
    %cst_10 = arith.constant 9.99999974E-6 : f32
    %28 = arith.addf %27, %cst_10 : f32
    %cst_11 = arith.constant 1.000000e+00 : f32
    %29 = arith.divf %cst_11, %28 : f32
    %30 = vector.broadcast %21 : f32 to vector<1x128xf32>
    %31 = arith.subf %11, %30 : vector<1x128xf32>
    %32 = vector.broadcast %29 : f32 to vector<1x128xf32>
    %33 = arith.mulf %31, %32 : vector<1x128xf32>
    %cst_12 = arith.constant 0.000000e+00 : f32
    %34 = vector.broadcast %cst_12 : f32 to vector<1x128xf32>
    %35 = arith.select %6, %33, %34 : vector<1x128xi1>, vector<1x128xf32>
    %c0_13 = arith.constant 0 : index
    %c0_14 = arith.constant 0 : index
    %36 = vector.load %arg2[%c0_13, %c0_14] : memref<1x128xf32, #tpu.memory_space<vmem>>, vector<1x128xf32>
    tpu.vector_store %arg2[%c0_13, %c0_14], %35 {strides = array<i32>} : memref<1x128xf32, #tpu.memory_space<vmem>>, vector<1x128xf32>,
    return
  }
}

</mosaic_0001>

<llo_original>
// kernel: get_advantages.1
$region0: #{get_advantages.1}
  #allocation0 [shape = 'u32[]', space=smem, size = 0x4, offset = 0x4, fixed_abs, tag = 'smem constant byte address 0x4 - core index']
  #allocation1 [shape = 'u32[144,128]{1,0:T(1,128)}', space=vmem, size = 0x12000, scoped, tag = 'internal scratch']
  %s0 = inlined_call_operand.vmem [shape: f32[1,128], index: 0, kind: input, shape index: {}]
  %s1 = inlined_call_operand.vmem [shape: f32[1,128], index: 1, kind: input, shape index: {}]
  %s2 = inlined_call_operand.vmem [shape: f32[1,128], index: 2, kind: output, shape index: {}]
  %s3 = sld [smem:[#allocation0]]
  $region18: #{get_advantages.1} parent=0
    _
  %s5 = ssub.s32 1, %s3
  %s6 = scalar_select 0, %s5, %s3
  // Predicated region
  $region2: #{get_advantages.1} parent=0 // pred_check
    _
  $region3: #{get_advantages.1} parent=0 // pred_check_branch
    %8 = sbr.rel (0) target = $region5
  $region4: #{get_advantages.1} parent=0 // pred_region
    _
  $region5: #{get_advantages.1} parent=0 // pred_fallthru
    _
  // Predicated region
  $region6: #{get_advantages.1} parent=0 // pred_check
    _
  $region7: #{get_advantages.1} parent=0 // pred_check_branch
    %10 = sbr.rel (0) target = $region9
  $region8: #{get_advantages.1} parent=0 // pred_region
    _
  $region9: #{get_advantages.1} parent=0 // pred_fallthru
    _
  %v11 = vlaneseq
  %v12 = vshrl.u32 %v11, 7
  %v13 = vlaneseq
  %v14 = vand.u32 %v13, 127
  %v15 = vmul.u32 %v12, 128
  %v16 = vadd.s32 %v15, %v14
  %vm17 = vcmp.lt.s32.totalorder %v16, 128
  %v18 = vld [vmem:[%s0] sm:$0x1]
  %v19 = vld [vmem:[%s1] sm:$0x1]
  %v20 = vsub.f32 %v18, %v19
  %v21 = vsel %vm17, %v20, 0.0
  %vm22 = vcmask 1040384
  %v23 = vsel %vm22, %v21, 0.0
  %24 = vadd.xlane.f32.xlu0 %v23
  %v25 = vpop.xlane.xlu0 %24
  %v26 = vrot.slane %v25, 4
  %v27 = vadd.f32 %v25, %v26
  %v28 = vrot.slane %v27, 2
  %v29 = vadd.f32 %v27, %v28
  %v30 = vrot.slane %v29, 1
  %v31 = vadd.f32 %v29, %v30
  %s32 = vtos %v31
  %v33 = vmul.f32 %v21, %v21
  %v34 = vsel %vm22, %v33, 0.0
  %35 = vadd.xlane.f32.xlu0 %v34
  %v36 = vpop.xlane.xlu0 %35
  %v37 = vrot.slane %v36, 4
  %v38 = vadd.f32 %v36, %v37
  %v39 = vrot.slane %v38, 2
  %v40 = vadd.f32 %v38, %v39
  %v41 = vrot.slane %v40, 1
  %v42 = vadd.f32 %v40, %v41
  %s43 = vtos %v42
  %s44 = smul.f32 %s32, 0.0078125
  %s45 = smul.f32 %s32, %s32
  %s46 = smul.f32 %s45, 0.0078125
  %s47 = ssub.f32 %s43, %s46
  %v48 = vrcp.pop 127.0
  %s49 = vtos %v48
  %s50 = smul.f32 %s47, %s49
  %s51 = smax.f32 %s50, 0.0
  %v52 = vstv %s51
  %v53 = vrsqrt.pop %v52
  %v54 = vmul.f32 %v52, %v53
  %vm55 = vcmp.eq.f32.partialorder %v52, inf
  %v56 = vsel %vm55, %v52, %v54
  %vm57 = vcmp.eq.f32.partialorder %v52, 0.0
  %v58 = vand.u32 %v52, 2147483648
  %v59 = vsel %vm57, %v58, %v56
  %s60 = vtos %v59
  %s61 = sadd.f32 %s60, 1e-05
  %v62 = vstv %s61
  %v63 = vrcp.pop %v62
  %s64 = vtos %v63
  %v65 = vstv %s44
  %v66 = vsub.f32 %v21, %v65
  %v67 = vstv %s64
  %v68 = vmul.f32 %v66, %v67
  %v69 = vsel %vm17, %v68, 0.0
  %70 = vst [vmem:[%s2] sm:$0x1] %v69
  // Predicated region
  $region10: #{get_advantages.1} parent=0 // pred_check
    _
  $region11: #{get_advantages.1} parent=0 // pred_check_branch
    %72 = sbr.rel (0) target = $region13
  $region12: #{get_advantages.1} parent=0 // pred_region
    _
  $region13: #{get_advantages.1} parent=0 // pred_fallthru
    _
  // Predicated region
  $region14: #{get_advantages.1} parent=0 // pred_check
    _
  $region15: #{get_advantages.1} parent=0 // pred_check_branch
    %74 = sbr.rel (0) target = $region17
  $region16: #{get_advantages.1} parent=0 // pred_region
    _
  $region17: #{get_advantages.1} parent=0 // pred_fallthru
    _

</llo_original>
